<compile_context>
chip_gen: v7x
topology: tpu7x:2x2x1
jax: 0.10.0
libtpu: 0.0.40
codegen_flags: <defaults>
</compile_context>

<pallas_src>
import math

import jax
import jax.numpy as jnp
from jax import lax
from jax.experimental import pallas as pl
from jax.experimental.pallas import tpu as pltpu


def _make_flip_kernel(seg: int):
    """Kernel reversing every contiguous `seg`-lane segment of its block."""

    def kernel(x_ref, o_ref):
        x = x_ref[...]
        r, c = x.shape
        lane = lax.broadcasted_iota(jnp.int32, (r, c), 1)
        # lane = g*seg + p  ->  rev = g*seg + (seg-1-p) = lane - 2*(lane%seg) + seg-1
        rev = lane - 2 * (lane % seg) + (seg - 1)
        o_ref[...] = jnp.take_along_axis(x, rev, axis=-1, mode="promise_in_bounds")

    return kernel


# ~2 MiB per buffer amortizes the ~0.35 us per-grid-step overhead while
# keeping (in + out) x double-buffering far below scoped VMEM on all chips.
_TARGET_TILE_BYTES = 2 * 1024 * 1024


def _flip_last_axis(x):
    """Reverse the last axis of x with a Pallas TPU kernel (dtype preserving)."""
    shape = x.shape
    w = shape[-1]
    rows = math.prod(shape[:-1])
    itemsize = jnp.dtype(x.dtype).itemsize

    # Lane-dense folding: pack k rows into the 128-lane dimension when W < 128.
    k = 1
    if w < 128 and 128 % w == 0 and rows % (128 // w) == 0:
        k = 128 // w
    r2, c = rows // k, k * w                 # free row-major view, no data movement
    x2d = x.reshape(r2, c)

    # Row tile: multiple of 8 sublanes (or the full row count), ~2 MiB/buffer.
    tr = min(r2, max(8, _TARGET_TILE_BYTES // (c * itemsize)))
    if tr < r2:
        tr = max(8, (tr // 8) * 8)
    grid = (pl.cdiv(r2, tr),)

    tile_bytes = tr * c * itemsize
    vmem_limit = int(min(64 * 1024 * 1024, max(16 * 1024 * 1024, 6 * tile_bytes)))

    out2d = pl.pallas_call(
        _make_flip_kernel(w),
        out_shape=jax.ShapeDtypeStruct((r2, c), x.dtype),
        grid_spec=pltpu.PrefetchScalarGridSpec(
            num_scalar_prefetch=0,
            grid=grid,
            in_specs=[pl.BlockSpec((tr, c), lambda i: (i, 0))],
            out_specs=pl.BlockSpec((tr, c), lambda i: (i, 0)),
        ),
        compiler_params=pltpu.CompilerParams(
            dimension_semantics=("parallel",),
            vmem_limit_bytes=vmem_limit,
        ),
        cost_estimate=pl.CostEstimate(
            flops=0,
            transcendentals=0,
            bytes_accessed=2 * rows * w * itemsize,
        ),
    )(x2d)
    return out2d.reshape(shape)


def random_vflip(img, label, key, p=0.5):
    """JAX/Pallas equivalent of RandomVFlip.forward(img, label)."""
    assert img.shape[-1] == label.shape[-1], "img/label trailing axes differ"
    # torch module uses np.random.rand(1) > p; here the draw comes from an
    # explicit jax.random key (stateless RNG).
    u = jax.random.uniform(key, ())

    def _flip(ops):
        im, lb = ops
        return _flip_last_axis(im), _flip_last_axis(lb)

    def _identity(ops):
        return ops

    # No-flip case (probability p) does zero work and zero HBM traffic.
    return lax.cond(u > p, _flip, _identity, (img, label))


if __name__ == "__main__":
    key = jax.random.PRNGKey(0)
    k_img, k_lab, k_flip = jax.random.split(key, 3)

    # NCHW image and NHW label mask (small shapes consistent with the module).
    img = jax.random.normal(k_img, (2, 4, 16, 16), dtype=jnp.float32)
    label = (jax.random.uniform(k_lab, (2, 16, 16)) > 0.5).astype(jnp.float32)

    fn = jax.jit(lambda i, l, k: random_vflip(i, l, k, p=0.5))
    img_out, lab_out = fn(img, label, k_flip)
    img_out = jax.block_until_ready(img_out)
    lab_out = jax.block_until_ready(lab_out)

    # Pure-JAX reference with the same flip decision.
    u = jax.random.uniform(k_flip, ())
    flip = bool(u > 0.5)
    img_ref = jnp.flip(img, axis=-1) if flip else img
    lab_ref = jnp.flip(label, axis=-1) if flip else label
    assert jnp.array_equal(img_out, img_ref), "img mismatch"
    assert jnp.array_equal(lab_out, lab_ref), "label mismatch"

    # Exercise the Pallas kernel unconditionally (independent of the random
    # draw) so the flip path is guaranteed to run and be verified.
    forced_img = jax.block_until_ready(_flip_last_axis(img))
    forced_lab = jax.block_until_ready(_flip_last_axis(label))
    assert jnp.array_equal(forced_img, jnp.flip(img, axis=-1)), "forced img flip mismatch"
    assert jnp.array_equal(forced_lab, jnp.flip(label, axis=-1)), "forced label flip mismatch"

    print("KERNEL_OK")
</pallas_src>

<mosaic_0001>
module attributes {stable_mosaic.version = 11 : i64} {
  func.func @kernel(%arg0: i32, %arg1: memref<16x128xf32, #tpu.memory_space<vmem>>, %arg2: memref<16x128xf32, #tpu.memory_space<vmem>>) attributes {dimension_semantics = [#tpu.dimension_semantics<parallel>], iteration_bounds = array<i64: 1>, scalar_prefetch = 0 : i64, scratch_operands = 0 : i64, tpu.core_type = #tpu.core_type<tc>, window_params = [{transform_indices = @transform_0, window_bounds = array<i64: 16, 128>}, {transform_indices = @transform_1, window_bounds = array<i64: 16, 128>}]} {
    %c0 = arith.constant 0 : index
    %c0_0 = arith.constant 0 : index
    %0 = vector.load %arg1[%c0, %c0_0] : memref<16x128xf32, #tpu.memory_space<vmem>>, vector<16x128xf32>
    %1 = tpu.iota {dimensions = array<i32: 1>} : vector<16x128xi32>
    %c16_i32 = arith.constant 16 : i32
    %c0_i32 = arith.constant 0 : i32
    %2 = arith.cmpi eq, %c16_i32, %c0_i32 : i32
    %c1_i32 = arith.constant 1 : i32
    %3 = arith.select %2, %c1_i32, %c16_i32 : i32
    %4 = vector.broadcast %3 : i32 to vector<16x128xi32>
    %5 = arith.remsi %1, %4 : vector<16x128xi32>
    %c0_i32_1 = arith.constant 0 : i32
    %6 = vector.broadcast %c0_i32_1 : i32 to vector<16x128xi32>
    %7 = arith.cmpi ne, %5, %6 : vector<16x128xi32>
    %c0_i32_2 = arith.constant 0 : i32
    %8 = vector.broadcast %c0_i32_2 : i32 to vector<16x128xi32>
    %9 = arith.cmpi slt, %5, %8 : vector<16x128xi32>
    %c0_i32_3 = arith.constant 0 : i32
    %10 = arith.cmpi slt, %3, %c0_i32_3 : i32
    %11 = vector.broadcast %10 : i1 to vector<16x128xi1>
    %12 = vector.broadcast %11 : vector<16x128xi1> to vector<16x128xi1>
    %13 = arith.xori %9, %12 : vector<16x128xi1>
    %14 = arith.andi %13, %7 : vector<16x128xi1>
    %15 = vector.broadcast %3 : i32 to vector<16x128xi32>
    %16 = arith.addi %5, %15 : vector<16x128xi32>
    %17 = arith.select %14, %16, %5 : vector<16x128xi1>, vector<16x128xi32>
    %c2_i32 = arith.constant 2 : i32
    %18 = vector.broadcast %c2_i32 : i32 to vector<16x128xi32>
    %19 = arith.muli %18, %17 : vector<16x128xi32>
    %20 = arith.subi %1, %19 : vector<16x128xi32>
    %c15_i32 = arith.constant 15 : i32
    %21 = vector.broadcast %c15_i32 : i32 to vector<16x128xi32>
    %22 = arith.addi %20, %21 : vector<16x128xi32>
    %23 = vector.shape_cast %22 : vector<16x128xi32> to vector<16x128x1xi32>
    %24 = vector.shape_cast %23 : vector<16x128x1xi32> to vector<16x128xi32>
    %25 = tpu.dynamic_gather %0[%24] in [1] : vector<16x128xf32>, vector<16x128xi32> -> vector<16x128xf32>
    %c0_4 = arith.constant 0 : index
    %c0_5 = arith.constant 0 : index
    %26 = vector.load %arg2[%c0_4, %c0_5] : memref<16x128xf32, #tpu.memory_space<vmem>>, vector<16x128xf32>
    tpu.vector_store %arg2[%c0_4, %c0_5], %25 {strides = array<i32>} : memref<16x128xf32, #tpu.memory_space<vmem>>, vector<16x128xf32>,
    return
  }
  func.func @transform_0(%arg0: i32) -> (i32, i32) {
    %c0_i32 = arith.constant 0 : i32
    %c0_i32_0 = arith.constant 0 : i32
    return %arg0, %c0_i32 : i32, i32
  }
  func.func @transform_1(%arg0: i32) -> (i32, i32) {
    %c0_i32 = arith.constant 0 : i32
    %c0_i32_0 = arith.constant 0 : i32
    return %arg0, %c0_i32 : i32, i32
  }
}

module attributes {stable_mosaic.version = 11 : i64} {
  func.func @kernel(%arg0: i32, %arg1: memref<4x128xf32, #tpu.memory_space<vmem>>, %arg2: memref<4x128xf32, #tpu.memory_space<vmem>>) attributes {dimension_semantics = [#tpu.dimension_semantics<parallel>], iteration_bounds = array<i64: 1>, scalar_prefetch = 0 : i64, scratch_operands = 0 : i64, tpu.core_type = #tpu.core_type<tc>, window_params = [{transform_indices = @transform_0, window_bounds = array<i64: 4, 128>}, {transform_indices = @transform_1, window_bounds = array<i64: 4, 128>}]} {
    %c0 = arith.constant 0 : index
    %c0_0 = arith.constant 0 : index
    %0 = vector.load %arg1[%c0, %c0_0] : memref<4x128xf32, #tpu.memory_space<vmem>>, vector<4x128xf32>
    %1 = tpu.iota {dimensions = array<i32: 1>} : vector<4x128xi32>
    %c16_i32 = arith.constant 16 : i32
    %c0_i32 = arith.constant 0 : i32
    %2 = arith.cmpi eq, %c16_i32, %c0_i32 : i32
    %c1_i32 = arith.constant 1 : i32
    %3 = arith.select %2, %c1_i32, %c16_i32 : i32
    %4 = vector.broadcast %3 : i32 to vector<4x128xi32>
    %5 = arith.remsi %1, %4 : vector<4x128xi32>
    %c0_i32_1 = arith.constant 0 : i32
    %6 = vector.broadcast %c0_i32_1 : i32 to vector<4x128xi32>
    %7 = arith.cmpi ne, %5, %6 : vector<4x128xi32>
    %c0_i32_2 = arith.constant 0 : i32
    %8 = vector.broadcast %c0_i32_2 : i32 to vector<4x128xi32>
    %9 = arith.cmpi slt, %5, %8 : vector<4x128xi32>
    %c0_i32_3 = arith.constant 0 : i32
    %10 = arith.cmpi slt, %3, %c0_i32_3 : i32
    %11 = vector.broadcast %10 : i1 to vector<4x128xi1>
    %12 = vector.broadcast %11 : vector<4x128xi1> to vector<4x128xi1>
    %13 = arith.xori %9, %12 : vector<4x128xi1>
    %14 = arith.andi %13, %7 : vector<4x128xi1>
    %15 = vector.broadcast %3 : i32 to vector<4x128xi32>
    %16 = arith.addi %5, %15 : vector<4x128xi32>
    %17 = arith.select %14, %16, %5 : vector<4x128xi1>, vector<4x128xi32>
    %c2_i32 = arith.constant 2 : i32
    %18 = vector.broadcast %c2_i32 : i32 to vector<4x128xi32>
    %19 = arith.muli %18, %17 : vector<4x128xi32>
    %20 = arith.subi %1, %19 : vector<4x128xi32>
    %c15_i32 = arith.constant 15 : i32
    %21 = vector.broadcast %c15_i32 : i32 to vector<4x128xi32>
    %22 = arith.addi %20, %21 : vector<4x128xi32>
    %23 = vector.shape_cast %22 : vector<4x128xi32> to vector<4x128x1xi32>
    %24 = vector.shape_cast %23 : vector<4x128x1xi32> to vector<4x128xi32>
    %25 = tpu.dynamic_gather %0[%24] in [1] : vector<4x128xf32>, vector<4x128xi32> -> vector<4x128xf32>
    %c0_4 = arith.constant 0 : index
    %c0_5 = arith.constant 0 : index
    %26 = vector.load %arg2[%c0_4, %c0_5] : memref<4x128xf32, #tpu.memory_space<vmem>>, vector<4x128xf32>
    tpu.vector_store %arg2[%c0_4, %c0_5], %25 {strides = array<i32>} : memref<4x128xf32, #tpu.memory_space<vmem>>, vector<4x128xf32>,
    return
  }
  func.func @transform_0(%arg0: i32) -> (i32, i32) {
    %c0_i32 = arith.constant 0 : i32
    %c0_i32_0 = arith.constant 0 : i32
    return %arg0, %c0_i32 : i32, i32
  }
  func.func @transform_1(%arg0: i32) -> (i32, i32) {
    %c0_i32 = arith.constant 0 : i32
    %c0_i32_0 = arith.constant 0 : i32
    return %arg0, %c0_i32 : i32, i32
  }
}

</mosaic_0001>

<llo_original>
// kernel: branch_1_fun.3
$region0: #{branch_1_fun.3}
  #allocation0 [shape = 'u32[]', space=smem, size = 0x4, offset = 0x4, fixed_abs, tag = 'smem constant byte address 0x4 - core index']
  #allocation1 [shape = 'u32[144,128]{1,0:T(1,128)}', space=vmem, size = 0x12000, scoped, tag = 'internal scratch']
  %s0 = inlined_call_operand.vmem [shape: f32[4,128], index: 0, kind: input, shape index: {}]
  %s1 = inlined_call_operand.vmem [shape: f32[4,128], index: 1, kind: output, shape index: {}]
  %s2 = sld [smem:[#allocation0]]
  $region14: #{branch_1_fun.3} parent=0
    _
  %s4 = ssub.s32 1, %s2
  %s5 = scalar_select 0, %s4, %s2
  // Predicated region
  $region2: #{branch_1_fun.3} parent=0 // pred_check
    _
  $region3: #{branch_1_fun.3} parent=0 // pred_check_branch
    %7 = sbr.rel (0) target = $region5
  $region4: #{branch_1_fun.3} parent=0 // pred_region
    _
  $region5: #{branch_1_fun.3} parent=0 // pred_fallthru
    _
  %v8 = vld [vmem:[%s0] sm:$0xf]
  %v9 = vlaneseq
  %v10 = vand.u32 %v9, 127
  %vm11 = vcmp.lt.s32.totalorder %v10, 0
  %v12 = vsub.s32 0, %v10
  %v13 = vsel %vm11, %v12, %v10
  %v14 = vshrl.u32 %v13, 4
  %v15 = vand.u32 %v13, 15
  %v16 = vsub.s32 0, %v15
  %v17 = vsel %vm11, %v16, %v15
  %vm18 = vcmp.ne.s32.totalorder %v17, 0
  %vm19 = vcmp.lt.s32.totalorder %v17, 0
  %vm20 = vmand %vm19, %vm18
  %v21 = vadd.s32 %v17, 16
  %v22 = vsel %vm20, %v21, %v17
  %v23 = vmul.u32 %v22, 2
  %v24 = vsub.s32 %v10, %v23
  %v25 = vadd.s32 %v24, 15
  %26 = vset.pattern.permute.xlu0 %v25
  %27 = vperm.xlu0 %26, %v8
  %v28 = vpop.permute.xlu0 %27
  %29 = vst [vmem:[%s1] sm:$0xf] %v28
  // Predicated region
  $region6: #{branch_1_fun.3} parent=0 // pred_check
    _
  $region7: #{branch_1_fun.3} parent=0 // pred_check_branch
    %31 = sbr.rel (0) target = $region9
  $region8: #{branch_1_fun.3} parent=0 // pred_region
    _
  $region9: #{branch_1_fun.3} parent=0 // pred_fallthru
    _
  // Predicated region
  $region10: #{branch_1_fun.3} parent=0 // pred_check
    _
  $region11: #{branch_1_fun.3} parent=0 // pred_check_branch
    %33 = sbr.rel (0) target = $region13
  $region12: #{branch_1_fun.3} parent=0 // pred_region
    _
  $region13: #{branch_1_fun.3} parent=0 // pred_fallthru
    _

// kernel: branch_1_fun.2
$region0: #{branch_1_fun.2}
  #allocation0 [shape = 'u32[]', space=smem, size = 0x4, offset = 0x4, fixed_abs, tag = 'smem constant byte address 0x4 - core index']
  #allocation1 [shape = 'u32[144,128]{1,0:T(1,128)}', space=vmem, size = 0x12000, scoped, tag = 'internal scratch']
  %s0 = inlined_call_operand.vmem [shape: f32[16,128], index: 0, kind: input, shape index: {}]
  %s1 = inlined_call_operand.vmem [shape: f32[16,128], index: 1, kind: output, shape index: {}]
  %s2 = sld [smem:[#allocation0]]
  $region14: #{branch_1_fun.2} parent=0
    _
  %s4 = ssub.s32 1, %s2
  %s5 = scalar_select 0, %s4, %s2
  // Predicated region
  $region2: #{branch_1_fun.2} parent=0 // pred_check
    _
  $region3: #{branch_1_fun.2} parent=0 // pred_check_branch
    %7 = sbr.rel (0) target = $region5
  $region4: #{branch_1_fun.2} parent=0 // pred_region
    _
  $region5: #{branch_1_fun.2} parent=0 // pred_fallthru
    _
  %v8 = vld [vmem:[%s0] sm:$0xff]
  %v9 = vld [vmem:[%s0 + $0x8] sm:$0xff]
  %v10 = vlaneseq
  %v11 = vand.u32 %v10, 127
  %vm12 = vcmp.lt.s32.totalorder %v11, 0
  %v13 = vsub.s32 0, %v11
  %v14 = vsel %vm12, %v13, %v11
  %v15 = vshrl.u32 %v14, 4
  %v16 = vand.u32 %v14, 15
  %v17 = vsub.s32 0, %v16
  %v18 = vsel %vm12, %v17, %v16
  %vm19 = vcmp.ne.s32.totalorder %v18, 0
  %vm20 = vcmp.lt.s32.totalorder %v18, 0
  %vm21 = vmand %vm20, %vm19
  %v22 = vadd.s32 %v18, 16
  %v23 = vsel %vm21, %v22, %v18
  %v24 = vmul.u32 %v23, 2
  %v25 = vsub.s32 %v11, %v24
  %v26 = vadd.s32 %v25, 15
  %27 = vset.pattern.permute.xlu0 %v26
  %28 = vperm.xlu0 %27, %v8
  %v29 = vpop.permute.xlu0 %28
  %30 = vset.pattern.permute.xlu0 %v26
  %31 = vperm.xlu0 %30, %v9
  %v32 = vpop.permute.xlu0 %31
  %33 = vst [vmem:[%s1] sm:$0xff] %v29
  %34 = vst [vmem:[%s1 + $0x8] sm:$0xff] %v32
  // Predicated region
  $region6: #{branch_1_fun.2} parent=0 // pred_check
    _
  $region7: #{branch_1_fun.2} parent=0 // pred_check_branch
    %36 = sbr.rel (0) target = $region9
  $region8: #{branch_1_fun.2} parent=0 // pred_region
    _
  $region9: #{branch_1_fun.2} parent=0 // pred_fallthru
    _
  // Predicated region
  $region10: #{branch_1_fun.2} parent=0 // pred_check
    _
  $region11: #{branch_1_fun.2} parent=0 // pred_check_branch
    %38 = sbr.rel (0) target = $region13
  $region12: #{branch_1_fun.2} parent=0 // pred_region
    _
  $region13: #{branch_1_fun.2} parent=0 // pred_fallthru
    _

</llo_original>
